<compile_context>
chip_gen: v7x
topology: tpu7x:2x2x1
jax: 0.10.0
libtpu: 0.0.40
codegen_flags: <defaults>
</compile_context>

<pallas_src>
import numpy as np
import jax
import jax.numpy as jnp
from jax.experimental import pallas as pl
from jax.experimental.pallas import tpu as pltpu


# ----------------------------------------------------------------------------
# Static per-tree routing constants (verified against the PyTorch BFS traversal):
#   factor_k = d @ S[k] + off[k]   (d at node if branch bit 0, 1 - d if bit 1)
#   mu[b, leaf] = prod_k factor_k[b, leaf]
# ----------------------------------------------------------------------------
def _routing_constants(depth):
    L = 2 ** depth
    S = np.zeros((depth, L, L), dtype=np.float32)
    off = np.zeros((depth, 1, L), dtype=np.float32)
    for k in range(depth):
        for leaf in range(L):
            n_k = leaf >> (depth - k)            # node-within-level (top k bits of leaf)
            j = (1 << k) + n_k                   # BFS decision-node index
            c = (leaf >> (depth - 1 - k)) & 1    # branch bit: 0 -> d, 1 -> 1 - d
            S[k, j, leaf] = 1.0 if c == 0 else -1.0
            off[k, 0, leaf] = float(c)
    return S, off


def _block_routing_constants(depth, L, trees_per_block):
    """Fused routing matrix for a block of TT trees.

    S_big:  [TT*L, depth*TT*L]  block-diagonal over trees, concatenated over depth
    off_big:[1,    depth*TT*L]
    Column order: level-major, then tree-major, then leaf (matches d / mu layout).
    """
    S, off = _routing_constants(depth)
    TT = trees_per_block
    eye = np.eye(TT, dtype=np.float32)
    s_levels = [np.kron(eye, S[k]) for k in range(depth)]          # [TT*L, TT*L] each
    off_levels = [np.tile(off[k], (1, TT)) for k in range(depth)]  # [1, TT*L] each
    return np.concatenate(s_levels, axis=1), np.concatenate(off_levels, axis=1)


# ----------------------------------------------------------------------------
# Pallas kernel: one grid step == one block of TT trees, accumulated into a
# resident lane-dense [B, Cpad] output block.
# ----------------------------------------------------------------------------
def make_forest_fn(batch, num_features, depth, num_classes_padded, trees_per_block, num_blocks):
    B, F, Cp, TT = batch, num_features, num_classes_padded, trees_per_block
    L = 2 ** depth
    TTL = TT * L

    def kernel(feat_ref, w_ref, b_ref, p_ref, s_ref, off_ref, out_ref):
        g = pl.program_id(0)

        feat = feat_ref[...]                                                  # [B, F]

        # Decision logits for all TT trees at once (mask already folded into the
        # pre-transposed weights): feat @ W_cat -> [B, TT*L]
        logits = jnp.dot(feat, w_ref[0], preferred_element_type=jnp.float32) + b_ref[0]
        d = jax.nn.sigmoid(logits)                                            # [B, TT*L]

        # Fused routing: one lane-dense matmul for all trees & all levels.
        factors = jnp.dot(d, s_ref[...], preferred_element_type=jnp.float32) + off_ref[...]
        mu = factors[:, 0:TTL]
        for k in range(1, depth):                        # depth is small & static
            mu = mu * factors[:, k * TTL:(k + 1) * TTL]  # [B, TT*L]

        # Leaf class distributions (softmax(pi)/num_trees precomputed, padded to a
        # lane-dense class axis): one dot reduces the whole tree block.
        part = jnp.dot(mu, p_ref[0], preferred_element_type=jnp.float32)      # [B, Cp]

        @pl.when(g == 0)
        def _():
            out_ref[...] = jnp.zeros_like(out_ref)

        out_ref[...] += part

    grid_spec = pltpu.PrefetchScalarGridSpec(
        num_scalar_prefetch=0,
        grid=(num_blocks,),
        in_specs=[
            pl.BlockSpec((B, F), lambda g: (0, 0)),               # features (resident)
            pl.BlockSpec((1, F, TTL), lambda g: (g, 0, 0)),       # folded, packed weights
            pl.BlockSpec((1, 1, TTL), lambda g: (g, 0, 0)),       # packed biases
            pl.BlockSpec((1, TTL, Cp), lambda g: (g, 0, 0)),      # packed scaled leaf probs
            pl.BlockSpec((TTL, depth * TTL), lambda g: (0, 0)),   # routing matrix (resident)
            pl.BlockSpec((1, depth * TTL), lambda g: (0, 0)),     # routing offsets (resident)
        ],
        out_specs=pl.BlockSpec((B, Cp), lambda g: (0, 0)),        # resident accumulator
    )

    return pl.pallas_call(
        kernel,
        out_shape=jax.ShapeDtypeStruct((B, Cp), jnp.float32),
        grid_spec=grid_spec,
        compiler_params=pltpu.CompilerParams(dimension_semantics=("arbitrary",)),
    )


# ----------------------------------------------------------------------------
# JAX wrapper: folds masks into weights, precomputes softmax(pi)/T, packs TT
# trees per lane-dense block, pads class axis to 128 lanes, calls the kernel.
# (For bandwidth-bound production shapes, cast W_cat / features to bfloat16 here
#  and keep preferred_element_type=f32; kept f32 for exact parity in this demo.)
# ----------------------------------------------------------------------------
def neural_decision_forest(features, params, depth, num_classes, trees_per_block=8):
    mask = params["mask"]   # [T, U, F]  one-hot feature selectors
    w = params["w"]         # [T, L, U]  decision-layer weights
    b = params["b"]         # [T, 1, L]  decision-layer biases
    pi = params["pi"]       # [T, L, C]  leaf class logits

    T, L, _ = w.shape
    F = mask.shape[-1]
    B = features.shape[0]
    C = num_classes

    TT = min(trees_per_block, T)
    num_blocks = -(-T // TT)
    T_pad = num_blocks * TT

    # (1) fold feature selection into weights and pre-transpose: [T, F, L]
    w_fold_T = jnp.einsum("tlu,tuf->tfl", w, mask)

    # (2) precompute softmax(pi) / T and pad class axis to a lane-dense width
    Cp = ((C + 127) // 128) * 128
    probs = jax.nn.softmax(pi, axis=-1) / T                       # [T, L, C]
    probs = jnp.pad(probs, ((0, 0), (0, 0), (0, Cp - C)))         # [T, L, Cp]

    # (3) zero-pad the tree axis (zero probs => zero contribution from pad trees)
    if T_pad != T:
        pad = T_pad - T
        w_fold_T = jnp.pad(w_fold_T, ((0, pad), (0, 0), (0, 0)))
        b = jnp.pad(b, ((0, pad), (0, 0), (0, 0)))
        probs = jnp.pad(probs, ((0, pad), (0, 0), (0, 0)))

    # (4) pack TT trees per block along the lane axis
    W_cat = w_fold_T.reshape(num_blocks, TT, F, L).transpose(0, 2, 1, 3).reshape(num_blocks, F, TT * L)
    b_cat = b.reshape(num_blocks, TT, 1, L).transpose(0, 2, 1, 3).reshape(num_blocks, 1, TT * L)
    P_cat = probs.reshape(num_blocks, TT * L, Cp)

    S_big, off_big = _block_routing_constants(depth, L, TT)

    forest = make_forest_fn(B, F, depth, Cp, TT, num_blocks)
    out = forest(features, W_cat, b_cat, P_cat, jnp.asarray(S_big), jnp.asarray(off_big))
    return out[:, :C]


# ----------------------------------------------------------------------------
# Deterministic parameter construction (mirrors NeuralDecisionTree.__init__ shapes)
# ----------------------------------------------------------------------------
def init_forest_params(num_trees, depth, num_features, used_features_rate, num_classes):
    L = 2 ** depth
    U = int(num_features * used_features_rate)
    rng = np.random.RandomState(0)
    eye = np.eye(num_features, dtype=np.float32)
    masks, ws, bs, pis = [], [], [], []
    bound = 1.0 / np.sqrt(U)
    for _ in range(num_trees):
        idx = rng.choice(np.arange(num_features), U, replace=False)
        masks.append(eye[idx])                                                  # [U, F]
        ws.append(rng.uniform(-bound, bound, size=(L, U)).astype(np.float32))   # [L, U]
        bs.append(rng.uniform(-bound, bound, size=(1, L)).astype(np.float32))   # [1, L]
        pis.append(rng.uniform(0.0, 1.0, size=(L, num_classes)).astype(np.float32))
    return dict(
        mask=jnp.asarray(np.stack(masks)),   # [T, U, F]
        w=jnp.asarray(np.stack(ws)),         # [T, L, U]
        b=jnp.asarray(np.stack(bs)),         # [T, 1, L]
        pi=jnp.asarray(np.stack(pis)),       # [T, L, C]
        U=U, L=L,
    )


# ----------------------------------------------------------------------------
# Pure-JAX reference (literal transcription of the PyTorch forward) for checking
# ----------------------------------------------------------------------------
def forest_ref(features, params, depth, num_trees):
    B = features.shape[0]
    L = 2 ** depth
    out = jnp.zeros((B, params["pi"].shape[-1]), jnp.float32)
    for t in range(num_trees):
        f = features @ params["mask"][t].T
        d = jax.nn.sigmoid(f @ params["w"][t].T + params["b"][t])        # [B, L]
        decisions = jnp.stack([d, 1.0 - d], axis=2)                      # [B, L, 2]
        mu = jnp.ones((B, 1, 1), jnp.float32)
        begin, end = 1, 2
        for level in range(depth):
            mu = jnp.reshape(mu, (B, -1, 1))
            mu = jnp.tile(mu, (1, 1, 2))
            mu = mu * decisions[:, begin:end, :]
            begin = end
            end = begin + 2 ** (level + 1)
        mu = jnp.reshape(mu, (B, L))
        probs = jax.nn.softmax(params["pi"][t], axis=-1)
        out = out + mu @ probs
    return out / num_trees


if __name__ == "__main__":
    # Small, forward-consistent config. num_trees=6 with trees_per_block=4 also
    # exercises the zero-padded last tree block and cross-step accumulation.
    num_trees = 6
    depth = 3
    num_features = 16
    used_features_rate = 0.5
    num_classes = 4
    batch = 2

    params = init_forest_params(num_trees, depth, num_features, used_features_rate, num_classes)

    key = jax.random.PRNGKey(0)
    features = jax.random.normal(key, (batch, num_features), dtype=jnp.float32)

    out = neural_decision_forest(features, params, depth, num_classes, trees_per_block=4)
    out = jax.block_until_ready(out)

    ref = forest_ref(features, params, depth, num_trees)
    np.testing.assert_allclose(np.asarray(out), np.asarray(ref), rtol=1e-5, atol=1e-5)

    print("KERNEL_OK")
</pallas_src>

<mosaic_0001>
module attributes {stable_mosaic.version = 11 : i64} {
  func.func @kernel(%arg0: i32, %arg1: memref<2x16xf32, #tpu.memory_space<vmem>>, %arg2: memref<1x16x32xf32, #tpu.memory_space<vmem>>, %arg3: memref<1x1x32xf32, #tpu.memory_space<vmem>>, %arg4: memref<1x32x128xf32, #tpu.memory_space<vmem>>, %arg5: memref<32x96xf32, #tpu.memory_space<vmem>>, %arg6: memref<1x96xf32, #tpu.memory_space<vmem>>, %arg7: memref<2x128xf32, #tpu.memory_space<vmem>>) attributes {dimension_semantics = [#tpu.dimension_semantics<arbitrary>], iteration_bounds = array<i64: 2>, scalar_prefetch = 0 : i64, scratch_operands = 0 : i64, tpu.core_type = #tpu.core_type<tc>, window_params = [{pipeline_mode = #tpu.pipeline_mode<synchronous>, transform_indices = @transform_0, window_bounds = array<i64: 2, 16>}, {transform_indices = @transform_1, window_bounds = array<i64: 1, 16, 32>}, {transform_indices = @transform_2, window_bounds = array<i64: 1, 1, 32>}, {transform_indices = @transform_3, window_bounds = array<i64: 1, 32, 128>}, {pipeline_mode = #tpu.pipeline_mode<synchronous>, transform_indices = @transform_4, window_bounds = array<i64: 32, 96>}, {pipeline_mode = #tpu.pipeline_mode<synchronous>, transform_indices = @transform_5, window_bounds = array<i64: 1, 96>}, {pipeline_mode = #tpu.pipeline_mode<synchronous>, transform_indices = @transform_6, window_bounds = array<i64: 2, 128>}]} {
    %c0 = arith.constant 0 : index
    %c0_0 = arith.constant 0 : index
    %0 = vector.load %arg1[%c0, %c0_0] : memref<2x16xf32, #tpu.memory_space<vmem>>, vector<2x16xf32>
    %c0_1 = arith.constant 0 : index
    %c0_2 = arith.constant 0 : index
    %c0_3 = arith.constant 0 : index
    %1 = vector.load %arg2[%c0_1, %c0_2, %c0_3] : memref<1x16x32xf32, #tpu.memory_space<vmem>>, vector<1x16x32xf32>
    %2 = vector.shape_cast %1 : vector<1x16x32xf32> to vector<16x32xf32>
    %cst = arith.constant dense<0.000000e+00> : vector<2x32xf32>
    %3 = tpu.matmul %0, %2, %cst {dimension_numbers = #tpu.dot_dimension_numbers<[1], [0], [0], [1], [0, 0, 1, 1], [], []>} : vector<2x16xf32>, vector<16x32xf32>, vector<2x32xf32> -> vector<2x32xf32>
    %c0_4 = arith.constant 0 : index
    %c0_5 = arith.constant 0 : index
    %c0_6 = arith.constant 0 : index
    %4 = vector.load %arg3[%c0_4, %c0_5, %c0_6] : memref<1x1x32xf32, #tpu.memory_space<vmem>>, vector<1x1x32xf32>
    %5 = vector.shape_cast %4 : vector<1x1x32xf32> to vector<1x32xf32>
    %6 = vector.broadcast %5 : vector<1x32xf32> to vector<2x32xf32>
    %7 = arith.addf %3, %6 : vector<2x32xf32>
    %8 = arith.negf %7 : vector<2x32xf32>
    %9 = math.exp %8 : vector<2x32xf32>
    %cst_7 = arith.constant 1.000000e+00 : f32
    %10 = vector.broadcast %cst_7 : f32 to vector<2x32xf32>
    %11 = arith.addf %10, %9 : vector<2x32xf32>
    %12 = arith.divf %10, %11 : vector<2x32xf32>
    %c0_8 = arith.constant 0 : index
    %c0_9 = arith.constant 0 : index
    %13 = vector.load %arg5[%c0_8, %c0_9] : memref<32x96xf32, #tpu.memory_space<vmem>>, vector<32x96xf32>
    %cst_10 = arith.constant dense<0.000000e+00> : vector<2x96xf32>
    %14 = tpu.matmul %12, %13, %cst_10 {dimension_numbers = #tpu.dot_dimension_numbers<[1], [0], [0], [1], [0, 0, 1, 1], [], []>} : vector<2x32xf32>, vector<32x96xf32>, vector<2x96xf32> -> vector<2x96xf32>
    %c0_11 = arith.constant 0 : index
    %c0_12 = arith.constant 0 : index
    %15 = vector.load %arg6[%c0_11, %c0_12] : memref<1x96xf32, #tpu.memory_space<vmem>>, vector<1x96xf32>
    %16 = vector.broadcast %15 : vector<1x96xf32> to vector<2x96xf32>
    %17 = arith.addf %14, %16 : vector<2x96xf32>
    %18 = vector.extract_strided_slice %17 {offsets = [0, 0], sizes = [2, 32], strides = [1, 1]} : vector<2x96xf32> to vector<2x32xf32>
    %19 = vector.extract_strided_slice %17 {offsets = [0, 32], sizes = [2, 32], strides = [1, 1]} : vector<2x96xf32> to vector<2x32xf32>
    %20 = arith.mulf %18, %19 : vector<2x32xf32>
    %21 = vector.extract_strided_slice %17 {offsets = [0, 64], sizes = [2, 32], strides = [1, 1]} : vector<2x96xf32> to vector<2x32xf32>
    %22 = arith.mulf %20, %21 : vector<2x32xf32>
    %c0_13 = arith.constant 0 : index
    %c0_14 = arith.constant 0 : index
    %c0_15 = arith.constant 0 : index
    %23 = vector.load %arg4[%c0_13, %c0_14, %c0_15] : memref<1x32x128xf32, #tpu.memory_space<vmem>>, vector<1x32x128xf32>
    %24 = vector.shape_cast %23 : vector<1x32x128xf32> to vector<32x128xf32>
    %cst_16 = arith.constant dense<0.000000e+00> : vector<2x128xf32>
    %25 = tpu.matmul %22, %24, %cst_16 {dimension_numbers = #tpu.dot_dimension_numbers<[1], [0], [0], [1], [0, 0, 1, 1], [], []>} : vector<2x32xf32>, vector<32x128xf32>, vector<2x128xf32> -> vector<2x128xf32>
    %c0_i32 = arith.constant 0 : i32
    %26 = arith.cmpi eq, %arg0, %c0_i32 : i32
    %27 = arith.extui %26 : i1 to i32
    %c0_i32_17 = arith.constant 0 : i32
    %28 = arith.cmpi ne, %27, %c0_i32_17 : i32
    scf.if %28 {
      %cst_22 = arith.constant 0.000000e+00 : f32
      %32 = vector.broadcast %cst_22 : f32 to vector<2x128xf32>
      %c0_23 = arith.constant 0 : index
      %c0_24 = arith.constant 0 : index
      %33 = vector.load %arg7[%c0_23, %c0_24] : memref<2x128xf32, #tpu.memory_space<vmem>>, vector<2x128xf32>
      tpu.vector_store %arg7[%c0_23, %c0_24], %32 {strides = array<i32>} : memref<2x128xf32, #tpu.memory_space<vmem>>, vector<2x128xf32>,
    } else {
    }
    %c0_18 = arith.constant 0 : index
    %c0_19 = arith.constant 0 : index
    %29 = vector.load %arg7[%c0_18, %c0_19] : memref<2x128xf32, #tpu.memory_space<vmem>>, vector<2x128xf32>
    %30 = arith.addf %29, %25 : vector<2x128xf32>
    %c0_20 = arith.constant 0 : index
    %c0_21 = arith.constant 0 : index
    %31 = vector.load %arg7[%c0_20, %c0_21] : memref<2x128xf32, #tpu.memory_space<vmem>>, vector<2x128xf32>
    tpu.vector_store %arg7[%c0_20, %c0_21], %30 {strides = array<i32>} : memref<2x128xf32, #tpu.memory_space<vmem>>, vector<2x128xf32>,
    return
  }
  func.func @transform_0(%arg0: i32) -> (i32, i32) {
    %c0_i32 = arith.constant 0 : i32
    %c0_i32_0 = arith.constant 0 : i32
    %c0_i32_1 = arith.constant 0 : i32
    return %c0_i32, %c0_i32_0 : i32, i32
  }
  func.func @transform_1(%arg0: i32) -> (i32, i32, i32) {
    %c0_i32 = arith.constant 0 : i32
    %c0_i32_0 = arith.constant 0 : i32
    %c0_i32_1 = arith.constant 0 : i32
    return %arg0, %c0_i32, %c0_i32_0 : i32, i32, i32
  }
  func.func @transform_2(%arg0: i32) -> (i32, i32, i32) {
    %c0_i32 = arith.constant 0 : i32
    %c0_i32_0 = arith.constant 0 : i32
    %c0_i32_1 = arith.constant 0 : i32
    return %arg0, %c0_i32, %c0_i32_0 : i32, i32, i32
  }
  func.func @transform_3(%arg0: i32) -> (i32, i32, i32) {
    %c0_i32 = arith.constant 0 : i32
    %c0_i32_0 = arith.constant 0 : i32
    %c0_i32_1 = arith.constant 0 : i32
    return %arg0, %c0_i32, %c0_i32_0 : i32, i32, i32
  }
  func.func @transform_4(%arg0: i32) -> (i32, i32) {
    %c0_i32 = arith.constant 0 : i32
    %c0_i32_0 = arith.constant 0 : i32
    %c0_i32_1 = arith.constant 0 : i32
    return %c0_i32, %c0_i32_0 : i32, i32
  }
  func.func @transform_5(%arg0: i32) -> (i32, i32) {
    %c0_i32 = arith.constant 0 : i32
    %c0_i32_0 = arith.constant 0 : i32
    %c0_i32_1 = arith.constant 0 : i32
    return %c0_i32, %c0_i32_0 : i32, i32
  }
  func.func @transform_6(%arg0: i32) -> (i32, i32) {
    %c0_i32 = arith.constant 0 : i32
    %c0_i32_0 = arith.constant 0 : i32
    %c0_i32_1 = arith.constant 0 : i32
    return %c0_i32, %c0_i32_0 : i32, i32
  }
}

</mosaic_0001>

<llo_original>
// kernel: tpu_custom_call.1
$region0: #{tpu_custom_call.1}
  #allocation0 [shape = 'u32[]', space=smem, size = 0x4, offset = 0x4, fixed_abs, tag = 'smem constant byte address 0x4 - core index']
  #allocation1 [shape = 'u32[144,128]{1,0:T(1,128)}', space=vmem, size = 0x12000, scoped, tag = 'internal scratch']
  %s0 = inlined_call_operand.hbm [shape: f32[2,16], index: 0, kind: input, shape index: {}]
  %s1 = inlined_call_operand.hbm [shape: f32[2,16,32], index: 1, kind: input, shape index: {}]
  %s2 = inlined_call_operand.vmem [shape: f32[2,1,32], index: 2, kind: input, shape index: {}]
  %s3 = inlined_call_operand.hbm [shape: f32[2,32,128], index: 3, kind: input, shape index: {}]
  %s4 = inlined_call_operand.hbm [shape: f32[32,96], index: 4, kind: input, shape index: {}]
  %s5 = inlined_call_operand.vmem [shape: f32[1,96], index: 5, kind: input, shape index: {}]
  %s6 = inlined_call_operand.hbm [shape: f32[2,128], index: 6, kind: output, shape index: {}]
  %s7 = sld [smem:[#allocation0]]
  $region77: #{tpu_custom_call.1} parent=0
    _
  %s9 = ssub.s32 1, %s7
  %s10 = scalar_select 0, %s9, %s7
  $region1: #{tpu_custom_call.1} parent=0
    #allocation2 [shape = 'u8[1024]{0}', space=vmem, size = 0x400, scoped, tag = 'input window, operand 0, single buffered']
    #allocation3 [shape = 's32[2]{0}', space=sflag, size = 0x8, scoped, tag = 'scoped memory for tpu_custom_call.1']
    #allocation4 [shape = 's32[2]{0}', space=sflag, size = 0x8, scoped, tag = 'scoped memory for tpu_custom_call.1']
    #allocation5 [shape = 'u8[16384]{0}', space=vmem, size = 0x4000, scoped, tag = 'input window, operand 1']
    #allocation6 [shape = 's32[2]{0}', space=sflag, size = 0x8, scoped, tag = 'scoped memory for tpu_custom_call.1']
    #allocation7 [shape = 'u8[32768]{0}', space=vmem, size = 0x8000, scoped, tag = 'input window, operand 3']
    #allocation8 [shape = 'u8[16384]{0}', space=vmem, size = 0x4000, scoped, tag = 'input window, operand 4, single buffered']
    #allocation9 [shape = 's32[1]{0}', space=sflag, size = 0x4, scoped, tag = 'scoped memory for tpu_custom_call.1']
    #allocation10 [shape = 'u8[1024]{0}', space=vmem, size = 0x400, scoped, tag = 'output window, operand 0, single buffered']
    %11 = vsyncpa [#allocation3], 0
    %12 = vsyncpa [#allocation6], 0
    %s13 = scalar_lea.sflag [#allocation6], 1
    %14 = vsyncpa %s13, 0
    %15 = vsyncpa [#allocation9], 0
    %16 = vsyncpa [#allocation4], 0
    loop: start=0, step=1, limit=4
    $region2: #{tpu_custom_call.1} parent=1 // loop_pre_header
      _
    $region3: #{tpu_custom_call.1} parent=1 // loop_header
      %s18 = sphi 0, %s22
      %p19 = scmp.ge.s32.totalorder %s18, 4
      %s26 = sphi 0, %s26
      %s28 = sphi 0, %s26
      %s29 = sphi 0, %s28
      %s43 = sphi 0, %s29
      %s49 = sphi 0, %s51
      %s52 = sphi 0, %s49
      %s53 = sphi 0, %s52
      %s69 = sphi 0, %s53
      %s75 = sphi 0, %s77
      %s78 = sphi 0, %s75
      %s79 = sphi 0, %s78
      %s95 = sphi 0, %s79
      %s101 = sphi 0, %s103
      %s104 = sphi 0, %s101
      %s105 = sphi 0, %s104
      %s121 = sphi 0, %s105
      %s125 = sphi 0, %s125
      %s127 = sphi 0, %s125
      %s128 = sphi 0, %s127
      %s142 = sphi 0, %s128
      %s146 = sphi 0, %s146
      %s148 = sphi 0, %s146
      %s149 = sphi 0, %s148
      %s163 = sphi 0, %s149
      %s167 = sphi 0, %s167
      %s169 = sphi 0, %s167
      %s170 = sphi 0, %s169
      %s184 = sphi 0, %s170
    $region4: #{tpu_custom_call.1} parent=1 // loop_header_branch
      %21 = sbr.rel (%p19) target = $region8
    $region5: #{tpu_custom_call.1} parent=1 // loop_body
      %s23 = ssub.s32 %s18, 1
      %s24 = ssub.s32 %s18, 2
      %s25 = sadd.s32 %s18, 1
      %s27 = sadd.s32 %s26, 1
      %p30 = scmp.eq.s32.totalorder %s18, 1
      %p31 = scmp.ne.s32.totalorder %s26, %s28
      %p32 = scmp.eq.s32.totalorder %s18, 0
      %p33 = por %p31, %p32
      %p34 = scmp.ne.s32.totalorder %s26, %s28
      %p35 = scmp.eq.s32.totalorder %s23, 1
      %p36 = por %p34, %p35
      %p37 = scmp.ne.s32.totalorder %s28, %s29
      %p38 = scmp.eq.s32.totalorder %s23, 0
      %p39 = por %p37, %p38
      %p40 = scmp.ne.s32.totalorder %s28, %s29
      %p41 = scmp.eq.s32.totalorder %s24, 1
      %p42 = por %p40, %p41
      %p44 = scmp.ne.s32.totalorder %s29, %s43
      %p45 = scmp.eq.s32.totalorder %s24, 0
      %p46 = por %p44, %p45
      %s47 = ssub.s32 %s18, %s25
      %p48 = scmp.eq.s32.totalorder %s47, 0
      %s50 = sadd.s32 %s49, 1
      %s51 = scalar_select %p48, %s49, %s50
      %p54 = pneg %p48
      %p55 = scmp.eq.s32.totalorder %s18, 1
      %p56 = por %p54, %p55
      %p57 = scmp.ne.s32.totalorder %s49, %s52
      %p58 = scmp.eq.s32.totalorder %s18, 0
      %p59 = por %p57, %p58
      %p60 = scmp.ne.s32.totalorder %s49, %s52
      %p61 = scmp.eq.s32.totalorder %s23, 1
      %p62 = por %p60, %p61
      %p63 = scmp.ne.s32.totalorder %s52, %s53
      %p64 = scmp.eq.s32.totalorder %s23, 0
      %p65 = por %p63, %p64
      %p66 = scmp.ne.s32.totalorder %s52, %s53
      %p67 = scmp.eq.s32.totalorder %s24, 1
      %p68 = por %p66, %p67
      %p70 = scmp.ne.s32.totalorder %s53, %s69
      %p71 = scmp.eq.s32.totalorder %s24, 0
      %p72 = por %p70, %p71
      %s73 = ssub.s32 %s18, %s25
      %p74 = scmp.eq.s32.totalorder %s73, 0
      %s76 = sadd.s32 %s75, 1
      %s77 = scalar_select %p74, %s75, %s76
      %p80 = pneg %p74
      %p81 = scmp.eq.s32.totalorder %s18, 1
      %p82 = por %p80, %p81
      %p83 = scmp.ne.s32.totalorder %s75, %s78
      %p84 = scmp.eq.s32.totalorder %s18, 0
      %p85 = por %p83, %p84
      %p86 = scmp.ne.s32.totalorder %s75, %s78
      %p87 = scmp.eq.s32.totalorder %s23, 1
      %p88 = por %p86, %p87
      %p89 = scmp.ne.s32.totalorder %s78, %s79
      %p90 = scmp.eq.s32.totalorder %s23, 0
      %p91 = por %p89, %p90
      %p92 = scmp.ne.s32.totalorder %s78, %s79
      %p93 = scmp.eq.s32.totalorder %s24, 1
      %p94 = por %p92, %p93
      %p96 = scmp.ne.s32.totalorder %s79, %s95
      %p97 = scmp.eq.s32.totalorder %s24, 0
      %p98 = por %p96, %p97
      %s99 = ssub.s32 %s18, %s25
      %p100 = scmp.eq.s32.totalorder %s99, 0
      %s102 = sadd.s32 %s101, 1
      %s103 = scalar_select %p100, %s101, %s102
      %p106 = pneg %p100
      %p107 = scmp.eq.s32.totalorder %s18, 1
      %p108 = por %p106, %p107
      %p109 = scmp.ne.s32.totalorder %s101, %s104
      %p110 = scmp.eq.s32.totalorder %s18, 0
      %p111 = por %p109, %p110
      %p112 = scmp.ne.s32.totalorder %s101, %s104
      %p113 = scmp.eq.s32.totalorder %s23, 1
      %p114 = por %p112, %p113
      %p115 = scmp.ne.s32.totalorder %s104, %s105
      %p116 = scmp.eq.s32.totalorder %s23, 0
      %p117 = por %p115, %p116
      %p118 = scmp.ne.s32.totalorder %s104, %s105
      %p119 = scmp.eq.s32.totalorder %s24, 1
      %p120 = por %p118, %p119
      %p122 = scmp.ne.s32.totalorder %s105, %s121
      %p123 = scmp.eq.s32.totalorder %s24, 0
      %p124 = por %p122, %p123
      %s126 = sadd.s32 %s125, 1
      %p129 = scmp.eq.s32.totalorder %s18, 1
      %p130 = scmp.ne.s32.totalorder %s125, %s127
      %p131 = scmp.eq.s32.totalorder %s18, 0
      %p132 = por %p130, %p131
      %p133 = scmp.ne.s32.totalorder %s125, %s127
      %p134 = scmp.eq.s32.totalorder %s23, 1
      %p135 = por %p133, %p134
      %p136 = scmp.ne.s32.totalorder %s127, %s128
      %p137 = scmp.eq.s32.totalorder %s23, 0
      %p138 = por %p136, %p137
      %p139 = scmp.ne.s32.totalorder %s127, %s128
      %p140 = scmp.eq.s32.totalorder %s24, 1
      %p141 = por %p139, %p140
      %p143 = scmp.ne.s32.totalorder %s128, %s142
      %p144 = scmp.eq.s32.totalorder %s24, 0
      %p145 = por %p143, %p144
      %s147 = sadd.s32 %s146, 1
      %p150 = scmp.eq.s32.totalorder %s18, 1
      %p151 = scmp.ne.s32.totalorder %s146, %s148
      %p152 = scmp.eq.s32.totalorder %s18, 0
      %p153 = por %p151, %p152
      %p154 = scmp.ne.s32.totalorder %s146, %s148
      %p155 = scmp.eq.s32.totalorder %s23, 1
      %p156 = por %p154, %p155
      %p157 = scmp.ne.s32.totalorder %s148, %s149
      %p158 = scmp.eq.s32.totalorder %s23, 0
      %p159 = por %p157, %p158
      %p160 = scmp.ne.s32.totalorder %s148, %s149
      %p161 = scmp.eq.s32.totalorder %s24, 1
      %p162 = por %p160, %p161
      %p164 = scmp.ne.s32.totalorder %s149, %s163
      %p165 = scmp.eq.s32.totalorder %s24, 0
      %p166 = por %p164, %p165
      %s168 = sadd.s32 %s167, 1
      %p171 = scmp.eq.s32.totalorder %s18, 1
      %p172 = scmp.ne.s32.totalorder %s167, %s169
      %p173 = scmp.eq.s32.totalorder %s18, 0
      %p174 = por %p172, %p173
      %p175 = scmp.ne.s32.totalorder %s167, %s169
      %p176 = scmp.eq.s32.totalorder %s23, 1
      %p177 = por %p175, %p176
      %p178 = scmp.ne.s32.totalorder %s169, %s170
      %p179 = scmp.eq.s32.totalorder %s23, 0
      %p180 = por %p178, %p179
      %p181 = scmp.ne.s32.totalorder %s169, %s170
      %p182 = scmp.eq.s32.totalorder %s24, 1
      %p183 = por %p181, %p182
      %p185 = scmp.ne.s32.totalorder %s170, %s184
      %p186 = scmp.eq.s32.totalorder %s24, 0
      %p187 = por %p185, %p186
      %p188 = scmp.le.s32.totalorder 1, %s18
      %p189 = scmp.lt.s32.totalorder %s18, 3
      %p190 = pnand %p188, %p189
      %p191 = pneg %p190
      // Predicated region
      $region9: #{tpu_custom_call.1} parent=5 // pred_check
        _
      $region10: #{tpu_custom_call.1} parent=5 // pred_check_branch
        %193 = sbr.rel (%p190) target = $region12
      $region11: #{tpu_custom_call.1} parent=5 // pred_region
        %s194 = ssub.s32 %s18, 1
        // Predicated region
        $region13: #{tpu_custom_call.1} parent=11 // pred_check
          %p195 = pneg %p39
        $region14: #{tpu_custom_call.1} parent=11 // pred_check_branch
          %197 = sbr.rel (%p195) target = $region16
        $region15: #{tpu_custom_call.1} parent=11 // pred_region
          %s199 = ssub.s32 32, 32
          %200 = vsyncadd [#allocation3], %s199
          %s202 = sshll.u32 [#allocation2], 4
          %s203 = int_to_ptr.vmem [resolvable:$true] %s202
          %205 = dma.hbm_to_vmem [thread:$0]  %s0, 32, %s203, [#allocation3]
        $region16: #{tpu_custom_call.1} parent=11 // pred_fallthru
          _
        // Predicated region
        $region17: #{tpu_custom_call.1} parent=11 // pred_check
          %p206 = pneg %p138
        $region18: #{tpu_custom_call.1} parent=11 // pred_check_branch
          %208 = sbr.rel (%p206) target = $region20
        $region19: #{tpu_custom_call.1} parent=11 // pred_region
          %s210 = ssub.s32 512, 512
          %211 = vsyncadd [#allocation9], %s210
          %s212 = sshll.u32 [#allocation8], 4
          %s213 = int_to_ptr.vmem [resolvable:$true] %s212
          %218 = dma.hbm_to_vmem [thread:$0]  %s4, 512, %s213, [#allocation9], 128, 128, 8
        $region20: #{tpu_custom_call.1} parent=11 // pred_fallthru
          _
        // Predicated region
        $region21: #{tpu_custom_call.1} parent=11 // pred_check
          %p219 = pneg %p159
        $region22: #{tpu_custom_call.1} parent=11 // pred_check_branch
          %221 = sbr.rel (%p219) target = $region24
        $region23: #{tpu_custom_call.1} parent=11 // pred_region
          _
        $region24: #{tpu_custom_call.1} parent=11 // pred_fallthru
          _
      $region12: #{tpu_custom_call.1} parent=5 // pred_fallthru
        _
      %p222 = scmp.lt.s32.totalorder %s18, 2
      // Predicated region
      $region25: #{tpu_custom_call.1} parent=5 // pred_check
        %p223 = pneg %p222
      $region26: #{tpu_custom_call.1} parent=5 // pred_check_branch
        %225 = sbr.rel (%p223) target = $region28
      $region27: #{tpu_custom_call.1} parent=5 // pred_region
        // Predicated region
        $region29: #{tpu_custom_call.1} parent=27 // pred_check
          %p226 = pneg %p59
        $region30: #{tpu_custom_call.1} parent=27 // pred_check_branch
          %228 = sbr.rel (%p226) target = $region32
        $region31: #{tpu_custom_call.1} parent=27 // pred_region
          %s229 = sand.u32 %s18, 1
          %s230 = scalar_lea.sflag [#allocation6], %s229
          %s231 = sand.u32 %s49, 1
          %s232 = smul.addr %s231, 16
          %s233 = scalar_lea.vmem [#allocation5], %s232
          %s235 = ssub.s32 256, 256
          %236 = vsyncadd %s230, %s235
          %s237 = smul.addr %s18, 2
          %s238 = smul.addr %s237, 128
          %s239 = scalar_lea.hbm %s1, %s238
          %s240 = sshll.u32 %s233, 4
          %s241 = int_to_ptr.vmem [resolvable:$true] %s240
          %246 = dma.hbm_to_vmem [thread:$0]  %s239, 256, %s241, %s230, 128, 128, 8
        $region32: #{tpu_custom_call.1} parent=27 // pred_fallthru
          _
        // Predicated region
        $region33: #{tpu_custom_call.1} parent=27 // pred_check
          %p247 = pneg %p85
        $region34: #{tpu_custom_call.1} parent=27 // pred_check_branch
          %249 = sbr.rel (%p247) target = $region36
        $region35: #{tpu_custom_call.1} parent=27 // pred_region
          %p250 = scmp.lt.s32.totalorder %s18, 1
          %s251 = scalar_select %p250, %s18, 1
          %s252 = scalar_lea.vmem %s2, %s251
        $region36: #{tpu_custom_call.1} parent=27 // pred_fallthru
          _
        // Predicated region
        $region37: #{tpu_custom_call.1} parent=27 // pred_check
          %p253 = pneg %p111
        $region38: #{tpu_custom_call.1} parent=27 // pred_check_branch
          %255 = sbr.rel (%p253) target = $region40
        $region39: #{tpu_custom_call.1} parent=27 // pred_region
          %s256 = sand.u32 %s18, 1
          %s257 = scalar_lea.sflag [#allocation6], %s256
          %s258 = sand.u32 %s101, 1
          %s259 = smul.addr %s258, 32
          %s260 = scalar_lea.vmem [#allocation7], %s259
          %s262 = ssub.s32 512, 512
          %263 = vsyncadd %s257, %s262
          %s264 = smul.addr %s18, 4
          %s265 = smul.addr %s264, 128
          %s266 = scalar_lea.hbm %s3, %s265
          %s267 = sshll.u32 %s260, 4
          %s268 = int_to_ptr.vmem [resolvable:$true] %s267
          %273 = dma.hbm_to_vmem [thread:$0]  %s266, 512, %s268, %s257, 128, 128, 8
        $region40: #{tpu_custom_call.1} parent=27 // pred_fallthru
          _
      $region28: #{tpu_custom_call.1} parent=5 // pred_fallthru
        _
      %p274 = scmp.le.s32.totalorder 1, %s18
      %p275 = scmp.lt.s32.totalorder %s18, 3
      %p276 = pnand %p274, %p275
      %p277 = pneg %p276
      // Predicated region
      $region41: #{tpu_custom_call.1} parent=5 // pred_check
        _
      $region42: #{tpu_custom_call.1} parent=5 // pred_check_branch
        %279 = sbr.rel (%p276) target = $region44
      $region43: #{tpu_custom_call.1} parent=5 // pred_region
        %s280 = ssub.s32 %s18, 1
        // Predicated region
        $region45: #{tpu_custom_call.1} parent=43 // pred_check
          %p281 = pneg %p39
        $region46: #{tpu_custom_call.1} parent=43 // pred_check_branch
          %283 = sbr.rel (%p281) target = $region48
        $region47: #{tpu_custom_call.1} parent=43 // pred_region
          %284 = dma.done [#allocation3], 32
        $region48: #{tpu_custom_call.1} parent=43 // pred_fallthru
          _
        %s285 = sand.u32 %s23, 1
        %s286 = scalar_lea.sflag [#allocation6], %s285
        %s287 = sand.u32 %s52, 1
        %s288 = smul.addr %s287, 16
        %s289 = scalar_lea.vmem [#allocation5], %s288
        // Predicated region
        $region49: #{tpu_custom_call.1} parent=43 // pred_check
          %p290 = pneg %p65
        $region50: #{tpu_custom_call.1} parent=43 // pred_check_branch
          %292 = sbr.rel (%p290) target = $region52
        $region51: #{tpu_custom_call.1} parent=43 // pred_region
          %293 = dma.done %s286, 256
        $region52: #{tpu_custom_call.1} parent=43 // pred_fallthru
          _
        %s294 = sand.u32 %s23, 1
        %s295 = scalar_lea.sflag [#allocation6], %s294
        %s296 = sand.u32 %s104, 1
        %s297 = smul.addr %s296, 32
        %s298 = scalar_lea.vmem [#allocation7], %s297
        // Predicated region
        $region53: #{tpu_custom_call.1} parent=43 // pred_check
          %p299 = pneg %p117
        $region54: #{tpu_custom_call.1} parent=43 // pred_check_branch
          %301 = sbr.rel (%p299) target = $region56
        $region55: #{tpu_custom_call.1} parent=43 // pred_region
          %302 = dma.done %s295, 512
        $region56: #{tpu_custom_call.1} parent=43 // pred_fallthru
          _
        // Predicated region
        $region57: #{tpu_custom_call.1} parent=43 // pred_check
          %p303 = pneg %p138
        $region58: #{tpu_custom_call.1} parent=43 // pred_check_branch
          %305 = sbr.rel (%p303) target = $region60
        $region59: #{tpu_custom_call.1} parent=43 // pred_region
          %306 = dma.done [#allocation9], 512
        $region60: #{tpu_custom_call.1} parent=43 // pred_fallthru
          _
        %p307 = pneg %p39
        %p308 = pneg %p36
        %s309 = sand.u32 %s23, 1
        %s310 = scalar_lea.sflag [#allocation6], %s309
        %s311 = sand.u32 %s52, 1
        %s312 = smul.addr %s311, 16
        %s313 = scalar_lea.vmem [#allocation5], %s312
        %p314 = pneg %p65
        %p315 = pneg %p62
        %p316 = scmp.lt.s32.totalorder %s23, 1
        %s317 = scalar_select %p316, %s23, 1
        %s318 = scalar_lea.vmem %s2, %s317
        %p319 = pneg %p91
        %p320 = pneg %p88
        %s321 = sand.u32 %s23, 1
        %s322 = scalar_lea.sflag [#allocation6], %s321
        %s323 = sand.u32 %s104, 1
        %s324 = smul.addr %s323, 32
        %s325 = scalar_lea.vmem [#allocation7], %s324
        %p326 = pneg %p117
        %p327 = pneg %p114
        %p328 = pneg %p138
        %p329 = pneg %p135
        %p330 = pneg %p159
        %p331 = pneg %p156
        %p332 = pneg %p180
        %p333 = pneg %p177
        %p334 = scmp.lt.s32.totalorder %s23, 1
        %s335 = scalar_select %p334, %s23, 1
        %s336 = scalar_lea.vmem %s2, %s335
        %v337 = vld [vmem:[#allocation2] sm:$0x3]
        %v338 = vld [vmem:[%s289] sm:$0xff]
        %v339 = vld [vmem:[%s289 + $0x8] sm:$0xff]
        %v340 = vld [vmem:[%s336] sm:$0x1]
        %v342 = vlaneseq
        %v343 = vshrl.u32 %v342, 7
        %v344 = vsub.s32 0, %v343
        %v345 = vrot.slane %v340, %v344
        %vm347 = vcmask 130048
        %v349 = vsel %vm347, %v337, 0
        %351 = vmatprep.subr.mxu0 0.0
        %352 = vmatpush1.msra.mxu0 %v338
        %353 = vmatprep.subr.mxu0 0.0
        %354 = vmatpush1.msra.mxu0 %v339
        %355 = vmatprep.subr.mxu0 0.0
        %356 = vmatpush1.msra.mxu0 0.0
        %357 = vmatprep.subr.mxu0 0.0
        %358 = vmatpush1.msra.mxu0 0.0
        %359 = vmatprep.subr.mxu0 0.0
        %360 = vmatpush1.msra.mxu0 0.0
        %361 = vmatprep.subr.mxu0 0.0
        %362 = vmatpush1.msra.mxu0 0.0
        %363 = vmatprep.subr.mxu0 0.0
        %364 = vmatpush1.msra.mxu0 0.0
        %365 = vmatprep.subr.mxu0 0.0
        %366 = vmatpush1.msra.mxu0 0.0
        %367 = vmatprep.subr.mxu0 0.0
        %368 = vmatpush1.msra.mxu0 0.0
        %369 = vmatprep.subr.mxu0 0.0
        %370 = vmatpush1.msra.mxu0 0.0
        %371 = vmatprep.subr.mxu0 0.0
        %372 = vmatpush1.msra.mxu0 0.0
        %373 = vmatprep.subr.mxu0 0.0
        %374 = vmatpush1.msra.mxu0 0.0
        %375 = vmatprep.subr.mxu0 0.0
        %376 = vmatpush1.msra.mxu0 0.0
        %377 = vmatprep.subr.mxu0 0.0
        %378 = vmatpush1.msra.mxu0 0.0
        %379 = vmatprep.subr.mxu0 0.0
        %380 = vmatpush1.msra.mxu0 0.0
        %381 = vmatprep.subr.mxu0 0.0
        %382 = vmatpush1.msra.mxu0 0.0
        %383 = vmatprep.subr.mxu0 0.0
        %384 = vmatpush1.msra.mxu0 0.0
        %385 = vmatprep.subr.mxu0 0.0
        %386 = vmatpush1.msra.mxu0 0.0
        %387 = vmatprep.subr.mxu0 0.0
        %388 = vmatpush1.msra.mxu0 0.0
        %389 = vmatprep.subr.mxu0 0.0
        %390 = vmatpush1.msra.mxu0 0.0
        %391 = vmatprep.subr.mxu0 0.0
        %392 = vmatpush1.msra.mxu0 0.0
        %393 = vmatprep.subr.mxu0 0.0
        %394 = vmatpush1.msra.mxu0 0.0
        %395 = vmatprep.subr.mxu0 0.0
        %396 = vmatpush1.msra.mxu0 0.0
        %397 = vmatprep.subr.mxu0 0.0
        %398 = vmatpush1.msra.mxu0 0.0
        %399 = vmatprep.subr.mxu0 0.0
        %400 = vmatpush1.msra.mxu0 0.0
        %401 = vmatprep.subr.mxu0 0.0
        %402 = vmatpush1.msra.mxu0 0.0
        %403 = vmatprep.subr.mxu0 0.0
        %404 = vmatpush1.msra.mxu0 0.0
        %405 = vmatprep.subr.mxu0 0.0
        %406 = vmatpush1.msra.mxu0 0.0
        %407 = vmatprep.subr.mxu0 0.0
        %408 = vmatpush1.msra.mxu0 0.0
        %409 = vmatprep.subr.mxu0 0.0
        %410 = vmatpush1.msra.mxu0 0.0
        %411 = vmatprep.subr.mxu0 0.0
        %412 = vmatpush1.msra.mxu0 0.0
        %413 = vmatprep.subr.mxu0 0.0
        %414 = vmatpush1.msra.mxu0 0.0
        %415 = vmatprep.mubr.f32.mxu0 0.0
        %416 = vmatmul.mubr.f32.gmra.mrb[0].mxu0 %v349
        %v417 = vpop.f32.mrb[0].mxu0
        %v418 = vadd.f32 %v345, %v417
        %v419 = vpop.f32.mrb[0].mxu0
        %420 = vdwg.mxu0
        %v421 = vxor.u32 %v418, 2147483648
        %v422 = vmul.f32 %v421, 1.442695
        %v423 = vpow.pop %v422
        %v424 = vadd.f32 %v423, 1.0
        %v425 = vrcp.pop %v424
        %v426 = vmul.f32 1.0, %v425
        %v427 = vld [vmem:[#allocation8] sm:$0xff]
        %v428 = vld [vmem:[#allocation8 + $0x8] sm:$0xff]
        %v429 = vld [vmem:[#allocation8 + $0x10] sm:$0xff]
        %v430 = vld [vmem:[#allocation8 + $0x18] sm:$0xff]
        %v431 = vld [vmem:[%s5] sm:$0x1]
        %v433 = vlaneseq
        %v434 = vshrl.u32 %v433, 7
        %v435 = vsub.s32 0, %v434
        %v436 = vrot.slane %v431, %v435
        %vm438 = vcmask 261120
        %v440 = vsel %vm438, %v426, 0
        %442 = vmatprep.subr.mxu0 0.0
        %443 = vmatpush1.msra.mxu0 %v427
        %444 = vmatprep.subr.mxu0 0.0
        %445 = vmatpush1.msra.mxu0 %v428
        %446 = vmatprep.subr.mxu0 0.0
        %447 = vmatpush1.msra.mxu0 %v429
        %448 = vmatprep.subr.mxu0 0.0
        %449 = vmatpush1.msra.mxu0 %v430
        %450 = vmatprep.subr.mxu0 0.0
        %451 = vmatpush1.msra.mxu0 0.0
        %452 = vmatprep.subr.mxu0 0.0
        %453 = vmatpush1.msra.mxu0 0.0
        %454 = vmatprep.subr.mxu0 0.0
        %455 = vmatpush1.msra.mxu0 0.0
        %456 = vmatprep.subr.mxu0 0.0
        %457 = vmatpush1.msra.mxu0 0.0
        %458 = vmatprep.subr.mxu0 0.0
        %459 = vmatpush1.msra.mxu0 0.0
        %460 = vmatprep.subr.mxu0 0.0
        %461 = vmatpush1.msra.mxu0 0.0
        %462 = vmatprep.subr.mxu0 0.0
        %463 = vmatpush1.msra.mxu0 0.0
        %464 = vmatprep.subr.mxu0 0.0
        %465 = vmatpush1.msra.mxu0 0.0
        %466 = vmatprep.subr.mxu0 0.0
        %467 = vmatpush1.msra.mxu0 0.0
        %468 = vmatprep.subr.mxu0 0.0
        %469 = vmatpush1.msra.mxu0 0.0
        %470 = vmatprep.subr.mxu0 0.0
        %471 = vmatpush1.msra.mxu0 0.0
        %472 = vmatprep.subr.mxu0 0.0
        %473 = vmatpush1.msra.mxu0 0.0
        %474 = vmatprep.subr.mxu0 0.0
        %475 = vmatpush1.msra.mxu0 0.0
        %476 = vmatprep.subr.mxu0 0.0
        %477 = vmatpush1.msra.mxu0 0.0
        %478 = vmatprep.subr.mxu0 0.0
        %479 = vmatpush1.msra.mxu0 0.0
        %480 = vmatprep.subr.mxu0 0.0
        %481 = vmatpush1.msra.mxu0 0.0
        %482 = vmatprep.subr.mxu0 0.0
        %483 = vmatpush1.msra.mxu0 0.0
        %484 = vmatprep.subr.mxu0 0.0
        %485 = vmatpush1.msra.mxu0 0.0
        %486 = vmatprep.subr.mxu0 0.0
        %487 = vmatpush1.msra.mxu0 0.0
        %488 = vmatprep.subr.mxu0 0.0
        %489 = vmatpush1.msra.mxu0 0.0
        %490 = vmatprep.subr.mxu0 0.0
        %491 = vmatpush1.msra.mxu0 0.0
        %492 = vmatprep.subr.mxu0 0.0
        %493 = vmatpush1.msra.mxu0 0.0
        %494 = vmatprep.subr.mxu0 0.0
        %495 = vmatpush1.msra.mxu0 0.0
        %496 = vmatprep.subr.mxu0 0.0
        %497 = vmatpush1.msra.mxu0 0.0
        %498 = vmatprep.subr.mxu0 0.0
        %499 = vmatpush1.msra.mxu0 0.0
        %500 = vmatprep.subr.mxu0 0.0
        %501 = vmatpush1.msra.mxu0 0.0
        %502 = vmatprep.subr.mxu0 0.0
        %503 = vmatpush1.msra.mxu0 0.0
        %504 = vmatprep.subr.mxu0 0.0
        %505 = vmatpush1.msra.mxu0 0.0
        %506 = vmatprep.mubr.f32.mxu0 0.0
        %507 = vmatmul.mubr.f32.gmra.mrb[0].mxu0 %v440
        %v508 = vpop.f32.mrb[0].mxu0
        %v509 = vadd.f32 %v436, %v508
        %v510 = vpop.f32.mrb[0].mxu0
        %511 = vdwg.mxu0
        %513 = vrot.lane.b32.xlu0 %v509, 96
        %v514 = vpop.permute.xlu0 %513
        %v516 = vmul.f32 %v509, %v514
        %517 = vrot.lane.b32.xlu0 %v509, 64
        %v518 = vpop.permute.xlu0 %517
        %v520 = vmul.f32 %v516, %v518
        %v521 = vld [vmem:[%s298] sm:$0xff]
        %v522 = vld [vmem:[%s298 + $0x8] sm:$0xff]
        %v523 = vld [vmem:[%s298 + $0x10] sm:$0xff]
        %v524 = vld [vmem:[%s298 + $0x18] sm:$0xff]
        %v526 = vsel %vm438, %v520, 0
        %528 = vmatprep.subr.mxu0 0.0
        %529 = vmatpush1.msra.mxu0 %v521
        %530 = vmatprep.subr.mxu0 0.0
        %531 = vmatpush1.msra.mxu0 %v522
        %532 = vmatprep.subr.mxu0 0.0
        %533 = vmatpush1.msra.mxu0 %v523
        %534 = vmatprep.subr.mxu0 0.0
        %535 = vmatpush1.msra.mxu0 %v524
        %536 = vmatprep.subr.mxu0 0.0
        %537 = vmatpush1.msra.mxu0 0.0
        %538 = vmatprep.subr.mxu0 0.0
        %539 = vmatpush1.msra.mxu0 0.0
        %540 = vmatprep.subr.mxu0 0.0
        %541 = vmatpush1.msra.mxu0 0.0
        %542 = vmatprep.subr.mxu0 0.0
        %543 = vmatpush1.msra.mxu0 0.0
        %544 = vmatprep.subr.mxu0 0.0
        %545 = vmatpush1.msra.mxu0 0.0
        %546 = vmatprep.subr.mxu0 0.0
        %547 = vmatpush1.msra.mxu0 0.0
        %548 = vmatprep.subr.mxu0 0.0
        %549 = vmatpush1.msra.mxu0 0.0
        %550 = vmatprep.subr.mxu0 0.0
        %551 = vmatpush1.msra.mxu0 0.0
        %552 = vmatprep.subr.mxu0 0.0
        %553 = vmatpush1.msra.mxu0 0.0
        %554 = vmatprep.subr.mxu0 0.0
        %555 = vmatpush1.msra.mxu0 0.0
        %556 = vmatprep.subr.mxu0 0.0
        %557 = vmatpush1.msra.mxu0 0.0
        %558 = vmatprep.subr.mxu0 0.0
        %559 = vmatpush1.msra.mxu0 0.0
        %560 = vmatprep.subr.mxu0 0.0
        %561 = vmatpush1.msra.mxu0 0.0
        %562 = vmatprep.subr.mxu0 0.0
        %563 = vmatpush1.msra.mxu0 0.0
        %564 = vmatprep.subr.mxu0 0.0
        %565 = vmatpush1.msra.mxu0 0.0
        %566 = vmatprep.subr.mxu0 0.0
        %567 = vmatpush1.msra.mxu0 0.0
        %568 = vmatprep.subr.mxu0 0.0
        %569 = vmatpush1.msra.mxu0 0.0
        %570 = vmatprep.subr.mxu0 0.0
        %571 = vmatpush1.msra.mxu0 0.0
        %572 = vmatprep.subr.mxu0 0.0
        %573 = vmatpush1.msra.mxu0 0.0
        %574 = vmatprep.subr.mxu0 0.0
        %575 = vmatpush1.msra.mxu0 0.0
        %576 = vmatprep.subr.mxu0 0.0
        %577 = vmatpush1.msra.mxu0 0.0
        %578 = vmatprep.subr.mxu0 0.0
        %579 = vmatpush1.msra.mxu0 0.0
        %580 = vmatprep.subr.mxu0 0.0
        %581 = vmatpush1.msra.mxu0 0.0
        %582 = vmatprep.subr.mxu0 0.0
        %583 = vmatpush1.msra.mxu0 0.0
        %584 = vmatprep.subr.mxu0 0.0
        %585 = vmatpush1.msra.mxu0 0.0
        %586 = vmatprep.subr.mxu0 0.0
        %587 = vmatpush1.msra.mxu0 0.0
        %588 = vmatprep.subr.mxu0 0.0
        %589 = vmatpush1.msra.mxu0 0.0
        %590 = vmatprep.subr.mxu0 0.0
        %591 = vmatpush1.msra.mxu0 0.0
        %592 = vmatprep.mubr.f32.mxu0 0.0
        %593 = vmatmul.mubr.f32.gmra.mrb[0].mxu0 %v526
        %v594 = vpop.f32.mrb[0].mxu0
        %v595 = vadd.f32 0.0, %v594
        %v596 = vpop.f32.mrb[0].mxu0
        %597 = vdwg.mxu0
        %p598 = scmp.eq.s32.totalorder %s23, 0
        // Predicated region
        $region61: #{tpu_custom_call.1} parent=43 // pred_check
          %p599 = pneg %p598
        $region62: #{tpu_custom_call.1} parent=43 // pred_check_branch
          %601 = sbr.rel (%p599) target = $region64
        $region63: #{tpu_custom_call.1} parent=43 // pred_region
          %602 = vst [vmem:[#allocation10] sm:$0x3] 0.0
        $region64: #{tpu_custom_call.1} parent=43 // pred_fallthru
          _
        %v603 = vld [vmem:[#allocation10] sm:$0x3]
        %v604 = vadd.f32 %v603, %v595
        %605 = vst [vmem:[#allocation10] sm:$0x3] %v604
        // Predicated region
        $region65: #{tpu_custom_call.1} parent=43 // pred_check
          %p606 = pneg %p177
        $region66: #{tpu_custom_call.1} parent=43 // pred_check_branch
          %608 = sbr.rel (%p606) target = $region68
        $region67: #{tpu_custom_call.1} parent=43 // pred_region
          %s610 = ssub.s32 32, 32
          %611 = vsyncadd [#allocation4], %s610
          %s613 = sshll.u32 [#allocation10], 4
          %s614 = int_to_ptr.vmem [resolvable:$true] %s613
          %616 = dma.vmem_to_hbm [thread:$0]  %s614, 32, %s6, [#allocation4]
        $region68: #{tpu_custom_call.1} parent=43 // pred_fallthru
          _
        // Predicated region
        $region69: #{tpu_custom_call.1} parent=43 // pred_check
          %p617 = pneg %p177
        $region70: #{tpu_custom_call.1} parent=43 // pred_check_branch
          %619 = sbr.rel (%p617) target = $region72
        $region71: #{tpu_custom_call.1} parent=43 // pred_region
          %620 = dma.done [#allocation4], 32
        $region72: #{tpu_custom_call.1} parent=43 // pred_fallthru
          _
      $region44: #{tpu_custom_call.1} parent=5 // pred_fallthru
        _
      %p621 = scmp.le.s32.totalorder 2, %s18
      // Predicated region
      $region73: #{tpu_custom_call.1} parent=5 // pred_check
        %p622 = pneg %p621
      $region74: #{tpu_custom_call.1} parent=5 // pred_check_branch
        %624 = sbr.rel (%p622) target = $region76
      $region75: #{tpu_custom_call.1} parent=5 // pred_region
        %s625 = ssub.s32 %s18, 2
      $region76: #{tpu_custom_call.1} parent=5 // pred_fallthru
        _
    $region6: #{tpu_custom_call.1} parent=1 // loop_footer
      %s22 = sadd.s32 1, %s18
    $region7: #{tpu_custom_call.1} parent=1 // loop_footer_branch
      %17 = sbr.rel target = $region3
    $region8: #{tpu_custom_call.1} parent=1 // loop_exit
      _
    %626 = vsyncpa [#allocation3], 1
    %s627 = scalar_lea.sflag [#allocation3], 1
    %628 = vsyncpa %s627, 1
    %629 = vsyncpa [#allocation6], 1
    %s630 = scalar_lea.sflag [#allocation6], 1
    %631 = vsyncpa %s630, 1
    %632 = vsyncpa [#allocation9], 1
    %633 = vsyncpa [#allocation4], 1
    %s634 = scalar_lea.sflag [#allocation4], 1
    %635 = vsyncpa %s634, 1

</llo_original>
